<compile_context>
chip_gen: v6e
topology: v6e:2x2x1
jax: 0.10.0
libtpu: 0.0.40
codegen_flags: <defaults>
</compile_context>

<pallas_src>
import jax
import jax.numpy as jnp
from jax.experimental import pallas as pl
from jax.experimental.pallas import tpu as pltpu

T = 8          # time steps
N = 2          # batch
INPUT = 16     # input_size  (!= output_size, so skip_layer is a real Linear)
HIDDEN = 32    # hidden_size
OUTPUT = 32    # output_size
BN_EPS = 1e-5


def _grn_kernel(x_ref, wf1_ref, w2_ref, wf3_ref, bias_ref, o_ref):
    # Static sizes derived from operand shapes.
    hidden = w2_ref.shape[0]
    out_sz = w2_ref.shape[1]

    x = x_ref[...]            # (R, INPUT)
    b = bias_ref[...]         # (3, PACKW)

    # Fused matmul 1: rows @ [Wskip^T(BN-folded) | W1^T]  -> [skip | pre-ELU hidden]
    r1 = jnp.dot(x, wf1_ref[...], preferred_element_type=jnp.float32) \
        + b[0:1, :out_sz + hidden]
    a = r1[:, :out_sz]                                        # BN-folded skip path
    h = r1[:, out_sz:out_sz + hidden]
    eta2 = jnp.where(h > 0, h, jnp.exp(jnp.minimum(h, 0.0)) - 1.0)   # ELU (overflow-safe)

    # dense2 (dropout is identity in eval mode)
    eta1 = jnp.dot(eta2, w2_ref[...], preferred_element_type=jnp.float32) \
        + b[1:2, :out_sz]

    # Fused matmul 2: eta1 @ [Wa^T(BN-folded) | Wb^T]  -> [GLU value | GLU gate logits]
    r3 = jnp.dot(eta1, wf3_ref[...], preferred_element_type=jnp.float32) \
        + b[2:3, :2 * out_sz]
    ga = r3[:, :out_sz]
    gate = jax.nn.sigmoid(r3[:, out_sz:2 * out_sz])

    # GLU * value + (BN-folded) skip  ==  full BatchNorm(GLU + skip)
    o_ref[...] = (gate * ga + a).astype(o_ref.dtype)


def prepack_params(params, bn_eps=BN_EPS):
    """One-time parameter packing (hoisted out of the hot path):
       - fold eval-mode BatchNorm into the skip and GLU.a linears,
       - pre-transpose weights so kernel matmuls are (rows, in) @ (in, out),
       - fuse [Wskip | W1] and [Wa | Wb] into single RHS operands,
       - pack all bias vectors into one small 2-D array.
    """
    s = params["gamma"] * jax.lax.rsqrt(params["running_var"] + bn_eps)   # (OUT,)
    shift = params["beta"] - s * params["running_mean"]                   # (OUT,)

    wskip_f = params["wskip"] * s[:, None]          # (OUT, IN) scaled per output row
    bskip_f = params["bskip"] * s + shift
    wa_f = params["wa"] * s[:, None]                # (OUT, OUT)
    ba_f = params["ba"] * s

    wf1 = jnp.concatenate([wskip_f.T, params["w1"].T], axis=1)   # (IN, OUT+HID)
    w2t = params["w2"].T                                         # (HID, OUT)
    wf3 = jnp.concatenate([wa_f.T, params["wb"].T], axis=1)      # (OUT, 2*OUT)

    hidden, out_sz = w2t.shape
    packw = max(out_sz + hidden, 2 * out_sz)

    def row(v):
        return jnp.pad(v, (0, packw - v.shape[0]))

    bias = jnp.stack([
        row(jnp.concatenate([bskip_f, params["b1"]])),   # biases for fused matmul 1
        row(params["b2"]),                               # bias for dense2
        row(jnp.concatenate([ba_f, params["bb"]])),      # biases for fused matmul 2
    ])                                                   # (3, packw)

    return dict(wf1=wf1, w2t=w2t, wf3=wf3, bias=bias, out_sz=out_sz)


def gated_residual_network(x, packed):
    t, n, in_sz = x.shape
    rows = t * n
    out_sz = packed["out_sz"]

    x2d = x.reshape(rows, in_sz)      # TemporalLayer collapse (free reshape)

    vmem = pl.BlockSpec(memory_space=pltpu.MemorySpace.VMEM)
    out2d = pl.pallas_call(
        _grn_kernel,
        out_shape=jax.ShapeDtypeStruct((rows, out_sz), x.dtype),
        in_specs=[vmem, vmem, vmem, vmem, vmem],
        out_specs=vmem,
    )(x2d, packed["wf1"], packed["w2t"], packed["wf3"], packed["bias"])

    return out2d.reshape(t, n, out_sz)


def _reference(x, params):
    """Pure-JAX reference of the PyTorch module's eval-mode forward (unfolded BN)."""
    t, n, in_sz = x.shape
    rows = x.reshape(t * n, in_sz)
    a = rows @ params["wskip"].T + params["bskip"]
    h = rows @ params["w1"].T + params["b1"]
    eta2 = jnp.where(h > 0, h, jnp.exp(jnp.minimum(h, 0.0)) - 1.0)
    eta1 = eta2 @ params["w2"].T + params["b2"]
    ga = eta1 @ params["wa"].T + params["ba"]
    gb = eta1 @ params["wb"].T + params["bb"]
    y = jax.nn.sigmoid(gb) * ga + a
    inv_std = jax.lax.rsqrt(params["running_var"] + BN_EPS)
    out = (y - params["running_mean"]) * inv_std * params["gamma"] + params["beta"]
    return out.reshape(t, n, -1)


if __name__ == "__main__":
    root = jax.random.PRNGKey(0)
    keys = jax.random.split(root, 10)
    ki = iter(keys)

    def linear_init(key, out_f, in_f):
        kw, kb = jax.random.split(key)
        bound = 1.0 / float(in_f) ** 0.5
        w = jax.random.uniform(kw, (out_f, in_f), minval=-bound, maxval=bound,
                               dtype=jnp.float32)
        b = jax.random.uniform(kb, (out_f,), minval=-bound, maxval=bound,
                               dtype=jnp.float32)
        return w, b

    x = jax.random.normal(next(ki), (T, N, INPUT), dtype=jnp.float32)
    wskip, bskip = linear_init(next(ki), OUTPUT, INPUT)
    w1, b1 = linear_init(next(ki), HIDDEN, INPUT)
    w2, b2 = linear_init(next(ki), OUTPUT, HIDDEN)
    wa, ba = linear_init(next(ki), OUTPUT, OUTPUT)
    wb, bb = linear_init(next(ki), OUTPUT, OUTPUT)
    gamma = jax.random.uniform(next(ki), (OUTPUT,), minval=0.5, maxval=1.5,
                               dtype=jnp.float32)
    beta = 0.1 * jax.random.normal(next(ki), (OUTPUT,), dtype=jnp.float32)
    running_mean = 0.1 * jax.random.normal(next(ki), (OUTPUT,), dtype=jnp.float32)
    running_var = jax.random.uniform(next(ki), (OUTPUT,), minval=0.5, maxval=1.5,
                                     dtype=jnp.float32)

    params = dict(wskip=wskip, bskip=bskip, w1=w1, b1=b1, w2=w2, b2=b2,
                  wa=wa, ba=ba, wb=wb, bb=bb,
                  gamma=gamma, beta=beta,
                  running_mean=running_mean, running_var=running_var)

    # One-time packing (BN folding, weight fusion, bias packing) — not in the hot path.
    packed = jax.tree_util.tree_map(jax.block_until_ready, prepack_params(params))

    out = gated_residual_network(x, packed)
    jax.block_until_ready(out)

    ref = _reference(x, params)
    assert out.shape == (T, N, OUTPUT)
    assert jnp.allclose(out, ref, atol=1e-4, rtol=1e-4)

    print("KERNEL_OK")
</pallas_src>

<mosaic_0001>
module attributes {stable_mosaic.version = 11 : i64} {
  func.func @_grn_kernel(%arg0: memref<16x16xf32, #tpu.memory_space<vmem>>, %arg1: memref<16x64xf32, #tpu.memory_space<vmem>>, %arg2: memref<32x32xf32, #tpu.memory_space<vmem>>, %arg3: memref<32x64xf32, #tpu.memory_space<vmem>>, %arg4: memref<3x64xf32, #tpu.memory_space<vmem>>, %arg5: memref<16x32xf32, #tpu.memory_space<vmem>>) attributes {dimension_semantics = [], scalar_prefetch = 0 : i64, scratch_operands = 0 : i64, tpu.core_type = #tpu.core_type<tc>} {
    %c0 = arith.constant 0 : index
    %c0_0 = arith.constant 0 : index
    %0 = vector.load %arg0[%c0, %c0_0] : memref<16x16xf32, #tpu.memory_space<vmem>>, vector<16x16xf32>
    %c0_1 = arith.constant 0 : index
    %c0_2 = arith.constant 0 : index
    %1 = vector.load %arg4[%c0_1, %c0_2] : memref<3x64xf32, #tpu.memory_space<vmem>>, vector<3x64xf32>
    %c0_3 = arith.constant 0 : index
    %c0_4 = arith.constant 0 : index
    %2 = vector.load %arg1[%c0_3, %c0_4] : memref<16x64xf32, #tpu.memory_space<vmem>>, vector<16x64xf32>
    %cst = arith.constant dense<0.000000e+00> : vector<16x64xf32>
    %3 = tpu.matmul %0, %2, %cst {dimension_numbers = #tpu.dot_dimension_numbers<[1], [0], [0], [1], [0, 0, 1, 1], [], []>} : vector<16x16xf32>, vector<16x64xf32>, vector<16x64xf32> -> vector<16x64xf32>
    %4 = vector.extract_strided_slice %1 {offsets = [0, 0], sizes = [1, 64], strides = [1, 1]} : vector<3x64xf32> to vector<1x64xf32>
    %5 = vector.broadcast %4 : vector<1x64xf32> to vector<16x64xf32>
    %6 = arith.addf %3, %5 : vector<16x64xf32>
    %7 = vector.extract_strided_slice %6 {offsets = [0, 0], sizes = [16, 32], strides = [1, 1]} : vector<16x64xf32> to vector<16x32xf32>
    %8 = vector.extract_strided_slice %6 {offsets = [0, 32], sizes = [16, 32], strides = [1, 1]} : vector<16x64xf32> to vector<16x32xf32>
    %cst_5 = arith.constant 0.000000e+00 : f32
    %9 = vector.broadcast %cst_5 : f32 to vector<16x32xf32>
    %10 = arith.cmpf ogt, %8, %9 : vector<16x32xf32>
    %cst_6 = arith.constant 0.000000e+00 : f32
    %11 = vector.broadcast %cst_6 : f32 to vector<16x32xf32>
    %12 = arith.minimumf %8, %11 : vector<16x32xf32>
    %13 = math.exp %12 : vector<16x32xf32>
    %cst_7 = arith.constant 1.000000e+00 : f32
    %14 = vector.broadcast %cst_7 : f32 to vector<16x32xf32>
    %15 = arith.subf %13, %14 : vector<16x32xf32>
    %16 = arith.select %10, %8, %15 : vector<16x32xi1>, vector<16x32xf32>
    %c0_8 = arith.constant 0 : index
    %c0_9 = arith.constant 0 : index
    %17 = vector.load %arg2[%c0_8, %c0_9] : memref<32x32xf32, #tpu.memory_space<vmem>>, vector<32x32xf32>
    %cst_10 = arith.constant dense<0.000000e+00> : vector<16x32xf32>
    %18 = tpu.matmul %16, %17, %cst_10 {dimension_numbers = #tpu.dot_dimension_numbers<[1], [0], [0], [1], [0, 0, 1, 1], [], []>} : vector<16x32xf32>, vector<32x32xf32>, vector<16x32xf32> -> vector<16x32xf32>
    %19 = vector.extract_strided_slice %1 {offsets = [1, 0], sizes = [1, 32], strides = [1, 1]} : vector<3x64xf32> to vector<1x32xf32>
    %20 = vector.broadcast %19 : vector<1x32xf32> to vector<16x32xf32>
    %21 = arith.addf %18, %20 : vector<16x32xf32>
    %c0_11 = arith.constant 0 : index
    %c0_12 = arith.constant 0 : index
    %22 = vector.load %arg3[%c0_11, %c0_12] : memref<32x64xf32, #tpu.memory_space<vmem>>, vector<32x64xf32>
    %cst_13 = arith.constant dense<0.000000e+00> : vector<16x64xf32>
    %23 = tpu.matmul %21, %22, %cst_13 {dimension_numbers = #tpu.dot_dimension_numbers<[1], [0], [0], [1], [0, 0, 1, 1], [], []>} : vector<16x32xf32>, vector<32x64xf32>, vector<16x64xf32> -> vector<16x64xf32>
    %24 = vector.extract_strided_slice %1 {offsets = [2, 0], sizes = [1, 64], strides = [1, 1]} : vector<3x64xf32> to vector<1x64xf32>
    %25 = vector.broadcast %24 : vector<1x64xf32> to vector<16x64xf32>
    %26 = arith.addf %23, %25 : vector<16x64xf32>
    %27 = vector.extract_strided_slice %26 {offsets = [0, 0], sizes = [16, 32], strides = [1, 1]} : vector<16x64xf32> to vector<16x32xf32>
    %28 = vector.extract_strided_slice %26 {offsets = [0, 32], sizes = [16, 32], strides = [1, 1]} : vector<16x64xf32> to vector<16x32xf32>
    %29 = arith.negf %28 : vector<16x32xf32>
    %30 = math.exp %29 : vector<16x32xf32>
    %cst_14 = arith.constant 1.000000e+00 : f32
    %31 = vector.broadcast %cst_14 : f32 to vector<16x32xf32>
    %32 = arith.addf %31, %30 : vector<16x32xf32>
    %33 = arith.divf %31, %32 : vector<16x32xf32>
    %34 = arith.mulf %33, %27 : vector<16x32xf32>
    %35 = arith.addf %34, %7 : vector<16x32xf32>
    %c0_15 = arith.constant 0 : index
    %c0_16 = arith.constant 0 : index
    %36 = vector.load %arg5[%c0_15, %c0_16] : memref<16x32xf32, #tpu.memory_space<vmem>>, vector<16x32xf32>
    tpu.vector_store %arg5[%c0_15, %c0_16], %35 {strides = array<i32>} : memref<16x32xf32, #tpu.memory_space<vmem>>, vector<16x32xf32>,
    return
  }
}

</mosaic_0001>

<llo_original>
// kernel: tpu_custom_call.1
$region0: #{tpu_custom_call.1}
  #allocation0 [shape = 'u32[]', space=smem, size = 0x4, offset = 0x4, fixed_abs, tag = 'smem constant byte address 0x4 - core index']
  #allocation1 [shape = 'u32[144,128]{1,0:T(1,128)}', space=vmem, size = 0x12000, scoped, tag = 'internal scratch']
  %s0 = inlined_call_operand.hbm [shape: f32[16,16], index: 0, kind: input, shape index: {}]
  %s1 = inlined_call_operand.hbm [shape: f32[16,64], index: 1, kind: input, shape index: {}]
  %s2 = inlined_call_operand.hbm [shape: f32[32,32], index: 2, kind: input, shape index: {}]
  %s3 = inlined_call_operand.hbm [shape: f32[32,64], index: 3, kind: input, shape index: {}]
  %s4 = inlined_call_operand.vmem [shape: f32[3,64], index: 4, kind: input, shape index: {}]
  %s5 = inlined_call_operand.hbm [shape: f32[16,32], index: 5, kind: output, shape index: {}]
  %s6 = sld [smem:[#allocation0]]
  $region46: #{tpu_custom_call.1} parent=0
    _
  %s8 = ssub.s32 1, %s6
  %s9 = scalar_select 0, %s8, %s6
  $region1: #{tpu_custom_call.1} parent=0
    #allocation2 [shape = 'u8[8192]{0}', space=vmem, size = 0x2000, scoped, tag = 'input window, operand 0, single buffered']
    #allocation3 [shape = 's32[1]{0}', space=sflag, size = 0x4, scoped, tag = 'scoped memory for tpu_custom_call.1']
    #allocation4 [shape = 's32[1]{0}', space=sflag, size = 0x4, scoped, tag = 'scoped memory for tpu_custom_call.1']
    #allocation5 [shape = 'u8[8192]{0}', space=vmem, size = 0x2000, scoped, tag = 'input window, operand 1, single buffered']
    #allocation6 [shape = 's32[1]{0}', space=sflag, size = 0x4, scoped, tag = 'scoped memory for tpu_custom_call.1']
    #allocation7 [shape = 'u8[16384]{0}', space=vmem, size = 0x4000, scoped, tag = 'input window, operand 2, single buffered']
    #allocation8 [shape = 'u8[16384]{0}', space=vmem, size = 0x4000, scoped, tag = 'input window, operand 3, single buffered']
    #allocation9 [shape = 's32[1]{0}', space=sflag, size = 0x4, scoped, tag = 'scoped memory for tpu_custom_call.1']
    #allocation10 [shape = 'u8[8192]{0}', space=vmem, size = 0x2000, scoped, tag = 'output window, operand 0, single buffered']
    %10 = vsyncpa [#allocation3], 0
    %11 = vsyncpa [#allocation6], 0
    %12 = vsyncpa [#allocation9], 0
    %13 = vsyncpa [#allocation4], 0
    // Predicated region
    $region2: #{tpu_custom_call.1} parent=1 // pred_check
      _
    $region3: #{tpu_custom_call.1} parent=1 // pred_check_branch
      %15 = sbr.rel (0) target = $region5
    $region4: #{tpu_custom_call.1} parent=1 // pred_region
      %s17 = ssub.s32 256, 256
      %18 = vsyncadd [#allocation3], %s17
      %s19 = sshll.u32 [#allocation2], 4
      %s20 = int_to_ptr.vmem [resolvable:$true] %s19
      %25 = dma.hbm_to_vmem [thread:$0]  %s0, 256, %s20, [#allocation3], 128, 128, 8
    $region5: #{tpu_custom_call.1} parent=1 // pred_fallthru
      _
    // Predicated region
    $region6: #{tpu_custom_call.1} parent=1 // pred_check
      _
    $region7: #{tpu_custom_call.1} parent=1 // pred_check_branch
      %27 = sbr.rel (0) target = $region9
    $region8: #{tpu_custom_call.1} parent=1 // pred_region
      %s29 = ssub.s32 256, 256
      %30 = vsyncadd [#allocation6], %s29
      %s31 = sshll.u32 [#allocation5], 4
      %s32 = int_to_ptr.vmem [resolvable:$true] %s31
      %37 = dma.hbm_to_vmem [thread:$0]  %s1, 256, %s32, [#allocation6], 128, 128, 8
    $region9: #{tpu_custom_call.1} parent=1 // pred_fallthru
      _
    // Predicated region
    $region10: #{tpu_custom_call.1} parent=1 // pred_check
      _
    $region11: #{tpu_custom_call.1} parent=1 // pred_check_branch
      %39 = sbr.rel (0) target = $region13
    $region12: #{tpu_custom_call.1} parent=1 // pred_region
      %s41 = ssub.s32 512, 512
      %42 = vsyncadd [#allocation6], %s41
      %s43 = sshll.u32 [#allocation7], 4
      %s44 = int_to_ptr.vmem [resolvable:$true] %s43
      %49 = dma.hbm_to_vmem [thread:$0]  %s2, 512, %s44, [#allocation6], 128, 128, 8
    $region13: #{tpu_custom_call.1} parent=1 // pred_fallthru
      _
    // Predicated region
    $region14: #{tpu_custom_call.1} parent=1 // pred_check
      _
    $region15: #{tpu_custom_call.1} parent=1 // pred_check_branch
      %51 = sbr.rel (0) target = $region17
    $region16: #{tpu_custom_call.1} parent=1 // pred_region
      %s53 = ssub.s32 512, 512
      %54 = vsyncadd [#allocation9], %s53
      %s55 = sshll.u32 [#allocation8], 4
      %s56 = int_to_ptr.vmem [resolvable:$true] %s55
      %61 = dma.hbm_to_vmem [thread:$0]  %s3, 512, %s56, [#allocation9], 128, 128, 8
    $region17: #{tpu_custom_call.1} parent=1 // pred_fallthru
      _
    // Predicated region
    $region18: #{tpu_custom_call.1} parent=1 // pred_check
      _
    $region19: #{tpu_custom_call.1} parent=1 // pred_check_branch
      %63 = sbr.rel (0) target = $region21
    $region20: #{tpu_custom_call.1} parent=1 // pred_region
      _
    $region21: #{tpu_custom_call.1} parent=1 // pred_fallthru
      _
    // Predicated region
    $region22: #{tpu_custom_call.1} parent=1 // pred_check
      _
    $region23: #{tpu_custom_call.1} parent=1 // pred_check_branch
      %65 = sbr.rel (0) target = $region25
    $region24: #{tpu_custom_call.1} parent=1 // pred_region
      %66 = dma.done [#allocation3], 256
    $region25: #{tpu_custom_call.1} parent=1 // pred_fallthru
      _
    // Predicated region
    $region26: #{tpu_custom_call.1} parent=1 // pred_check
      _
    $region27: #{tpu_custom_call.1} parent=1 // pred_check_branch
      %68 = sbr.rel (0) target = $region29
    $region28: #{tpu_custom_call.1} parent=1 // pred_region
      %69 = dma.done [#allocation6], 256
    $region29: #{tpu_custom_call.1} parent=1 // pred_fallthru
      _
    // Predicated region
    $region30: #{tpu_custom_call.1} parent=1 // pred_check
      _
    $region31: #{tpu_custom_call.1} parent=1 // pred_check_branch
      %71 = sbr.rel (0) target = $region33
    $region32: #{tpu_custom_call.1} parent=1 // pred_region
      %72 = dma.done [#allocation6], 512
    $region33: #{tpu_custom_call.1} parent=1 // pred_fallthru
      _
    // Predicated region
    $region34: #{tpu_custom_call.1} parent=1 // pred_check
      _
    $region35: #{tpu_custom_call.1} parent=1 // pred_check_branch
      %74 = sbr.rel (0) target = $region37
    $region36: #{tpu_custom_call.1} parent=1 // pred_region
      %75 = dma.done [#allocation9], 512
    $region37: #{tpu_custom_call.1} parent=1 // pred_fallthru
      _
    %v76 = vld [vmem:[#allocation2] sm:$0xff]
    %v77 = vld [vmem:[#allocation2 + $0x8] sm:$0xff]
    %v78 = vld [vmem:[%s4] sm:$0x7]
    %v79 = vld [vmem:[#allocation5] sm:$0xff]
    %v80 = vld [vmem:[#allocation5 + $0x8] sm:$0xff]
    %v81 = vlaneseq
    %v82 = vshrl.u32 %v81, 7
    %v83 = vsub.s32 0, %v82
    %v84 = vrot.slane %v78, %v83
    %vm85 = vcmask 130048
    %v87 = vsel %vm85, %v76, 0
    %v90 = vsel %vm85, %v77, 0
    %92 = vmatprep.subr.mxu0 0.0
    %93 = vmatpush1.msra.mxu0 0.0
    %94 = vmatprep.subr.mxu0 0.0
    %95 = vmatpush1.msra.mxu0 0.0
    %96 = vmatprep.subr.mxu0 0.0
    %97 = vmatpush1.msra.mxu0 0.0
    %98 = vmatprep.subr.mxu0 0.0
    %99 = vmatpush1.msra.mxu0 0.0
    %100 = vmatprep.subr.mxu0 0.0
    %101 = vmatpush1.msra.mxu0 0.0
    %102 = vmatprep.subr.mxu0 0.0
    %103 = vmatpush1.msra.mxu0 0.0
    %104 = vmatprep.subr.mxu0 0.0
    %105 = vmatpush1.msra.mxu0 0.0
    %106 = vmatprep.subr.mxu0 0.0
    %107 = vmatpush1.msra.mxu0 0.0
    %108 = vmatprep.subr.mxu0 0.0
    %109 = vmatpush1.msra.mxu0 0.0
    %110 = vmatprep.subr.mxu0 0.0
    %111 = vmatpush1.msra.mxu0 0.0
    %112 = vmatprep.subr.mxu0 0.0
    %113 = vmatpush1.msra.mxu0 0.0
    %114 = vmatprep.subr.mxu0 0.0
    %115 = vmatpush1.msra.mxu0 0.0
    %116 = vmatprep.subr.mxu0 0.0
    %117 = vmatpush1.msra.mxu0 0.0
    %118 = vmatprep.subr.mxu0 0.0
    %119 = vmatpush1.msra.mxu0 0.0
    %120 = vmatprep.subr.mxu0 0.0
    %121 = vmatpush1.msra.mxu0 %v80
    %122 = vmatprep.subr.mxu0 0.0
    %123 = vmatpush1.msra.mxu0 %v79
    %124 = vmatprep.subr.mxu0 0.0
    %125 = vmatpush2.msra.mxu0 0.0
    %126 = vmatprep.subr.mxu0 0.0
    %127 = vmatpush2.msra.mxu0 0.0
    %128 = vmatprep.subr.mxu0 0.0
    %129 = vmatpush2.msra.mxu0 0.0
    %130 = vmatprep.subr.mxu0 0.0
    %131 = vmatpush2.msra.mxu0 0.0
    %132 = vmatprep.subr.mxu0 0.0
    %133 = vmatpush2.msra.mxu0 0.0
    %134 = vmatprep.subr.mxu0 0.0
    %135 = vmatpush2.msra.mxu0 0.0
    %136 = vmatprep.subr.mxu0 0.0
    %137 = vmatpush2.msra.mxu0 0.0
    %138 = vmatprep.subr.mxu0 0.0
    %139 = vmatpush2.msra.mxu0 0.0
    %140 = vmatprep.subr.mxu0 0.0
    %141 = vmatpush2.msra.mxu0 0.0
    %142 = vmatprep.subr.mxu0 0.0
    %143 = vmatpush2.msra.mxu0 0.0
    %144 = vmatprep.subr.mxu0 0.0
    %145 = vmatpush2.msra.mxu0 0.0
    %146 = vmatprep.subr.mxu0 0.0
    %147 = vmatpush2.msra.mxu0 0.0
    %148 = vmatprep.subr.mxu0 0.0
    %149 = vmatpush2.msra.mxu0 0.0
    %150 = vmatprep.subr.mxu0 0.0
    %151 = vmatpush2.msra.mxu0 0.0
    %152 = vmatprep.subr.mxu0 0.0
    %153 = vmatpush2.msra.mxu0 0.0
    %154 = vmatprep.subr.mxu0 0.0
    %155 = vmatpush2.msra.mxu0 0.0
    %156 = vmatprep.mubr.f32.mxu0 0.0
    %157 = vmatmul.mubr.f32.gmra.mxu0 %v87
    %v158 = vpop.f32.mrf.mxu0
    %v159 = vadd.f32 %v84, %v158
    %v160 = vpop.f32.mrf.mxu0
    %161 = vmatprep.mubr.f32.mxu0 0.0
    %162 = vmatmul.mubr.f32.gmra.mxu0 %v90
    %v163 = vpop.f32.mrf.mxu0
    %v164 = vadd.f32 %v84, %v163
    %v165 = vpop.f32.mrf.mxu0
    %166 = vdwg.mxu0
    %vm167 = vcmp.gt.f32.partialorder %v159, 0.0
    %vm168 = vcmp.gt.f32.partialorder %v164, 0.0
    %v169 = vmin.f32 %v159, 0.0
    %v170 = vmin.f32 %v164, 0.0
    %v171 = vmul.f32 %v169, 1.442695
    %v172 = vpow.pop %v171
    %v173 = vmul.f32 %v170, 1.442695
    %v174 = vpow.pop %v173
    %v175 = vsub.f32 %v172, 1.0
    %v176 = vsub.f32 %v174, 1.0
    %v177 = vsel %vm167, %v159, %v175
    %v178 = vsel %vm168, %v164, %v176
    %v179 = vld [vmem:[#allocation7] sm:$0xff]
    %v180 = vld [vmem:[#allocation7 + $0x8] sm:$0xff]
    %v181 = vld [vmem:[#allocation7 + $0x10] sm:$0xff]
    %v182 = vld [vmem:[#allocation7 + $0x18] sm:$0xff]
    %v183 = vlaneseq
    %v184 = vshrl.u32 %v183, 7
    %v185 = vsub.s32 1, %v184
    %v186 = vrot.slane %v78, %v185
    %189 = vrot.lane.b32.xlu0 %v177, 96
    %v190 = vpop.permute.xlu0 %189
    %191 = vrot.lane.b32.xlu0 %v178, 96
    %v192 = vpop.permute.xlu0 %191
    %vm193 = vcmask 261120
    %v194 = vsel %vm193, %v190, 0
    %v196 = vsel %vm193, %v192, 0
    %198 = vmatprep.subr.mxu0 0.0
    %199 = vmatpush1.msra.mxu0 0.0
    %200 = vmatprep.subr.mxu0 0.0
    %201 = vmatpush1.msra.mxu0 0.0
    %202 = vmatprep.subr.mxu0 0.0
    %203 = vmatpush1.msra.mxu0 0.0
    %204 = vmatprep.subr.mxu0 0.0
    %205 = vmatpush1.msra.mxu0 0.0
    %206 = vmatprep.subr.mxu0 0.0
    %207 = vmatpush1.msra.mxu0 0.0
    %208 = vmatprep.subr.mxu0 0.0
    %209 = vmatpush1.msra.mxu0 0.0
    %210 = vmatprep.subr.mxu0 0.0
    %211 = vmatpush1.msra.mxu0 0.0
    %212 = vmatprep.subr.mxu0 0.0
    %213 = vmatpush1.msra.mxu0 0.0
    %214 = vmatprep.subr.mxu0 0.0
    %215 = vmatpush1.msra.mxu0 0.0
    %216 = vmatprep.subr.mxu0 0.0
    %217 = vmatpush1.msra.mxu0 0.0
    %218 = vmatprep.subr.mxu0 0.0
    %219 = vmatpush1.msra.mxu0 0.0
    %220 = vmatprep.subr.mxu0 0.0
    %221 = vmatpush1.msra.mxu0 0.0
    %222 = vmatprep.subr.mxu0 0.0
    %223 = vmatpush1.msra.mxu0 %v182
    %224 = vmatprep.subr.mxu0 0.0
    %225 = vmatpush1.msra.mxu0 %v181
    %226 = vmatprep.subr.mxu0 0.0
    %227 = vmatpush1.msra.mxu0 %v180
    %228 = vmatprep.subr.mxu0 0.0
    %229 = vmatpush1.msra.mxu0 %v179
    %230 = vmatprep.subr.mxu0 0.0
    %231 = vmatpush2.msra.mxu0 0.0
    %232 = vmatprep.subr.mxu0 0.0
    %233 = vmatpush2.msra.mxu0 0.0
    %234 = vmatprep.subr.mxu0 0.0
    %235 = vmatpush2.msra.mxu0 0.0
    %236 = vmatprep.subr.mxu0 0.0
    %237 = vmatpush2.msra.mxu0 0.0
    %238 = vmatprep.subr.mxu0 0.0
    %239 = vmatpush2.msra.mxu0 0.0
    %240 = vmatprep.subr.mxu0 0.0
    %241 = vmatpush2.msra.mxu0 0.0
    %242 = vmatprep.subr.mxu0 0.0
    %243 = vmatpush2.msra.mxu0 0.0
    %244 = vmatprep.subr.mxu0 0.0
    %245 = vmatpush2.msra.mxu0 0.0
    %246 = vmatprep.subr.mxu0 0.0
    %247 = vmatpush2.msra.mxu0 0.0
    %248 = vmatprep.subr.mxu0 0.0
    %249 = vmatpush2.msra.mxu0 0.0
    %250 = vmatprep.subr.mxu0 0.0
    %251 = vmatpush2.msra.mxu0 0.0
    %252 = vmatprep.subr.mxu0 0.0
    %253 = vmatpush2.msra.mxu0 0.0
    %254 = vmatprep.subr.mxu0 0.0
    %255 = vmatpush2.msra.mxu0 0.0
    %256 = vmatprep.subr.mxu0 0.0
    %257 = vmatpush2.msra.mxu0 0.0
    %258 = vmatprep.subr.mxu0 0.0
    %259 = vmatpush2.msra.mxu0 0.0
    %260 = vmatprep.subr.mxu0 0.0
    %261 = vmatpush2.msra.mxu0 0.0
    %262 = vmatprep.mubr.f32.mxu0 0.0
    %263 = vmatmul.mubr.f32.gmra.mxu0 %v194
    %v264 = vpop.f32.mrf.mxu0
    %v265 = vadd.f32 %v186, %v264
    %v266 = vpop.f32.mrf.mxu0
    %267 = vmatprep.mubr.f32.mxu0 0.0
    %268 = vmatmul.mubr.f32.gmra.mxu0 %v196
    %v269 = vpop.f32.mrf.mxu0
    %v270 = vadd.f32 %v186, %v269
    %v271 = vpop.f32.mrf.mxu0
    %272 = vdwg.mxu0
    %v273 = vld [vmem:[#allocation8] sm:$0xff]
    %v274 = vld [vmem:[#allocation8 + $0x8] sm:$0xff]
    %v275 = vld [vmem:[#allocation8 + $0x10] sm:$0xff]
    %v276 = vld [vmem:[#allocation8 + $0x18] sm:$0xff]
    %v277 = vlaneseq
    %v278 = vshrl.u32 %v277, 7
    %v279 = vsub.s32 2, %v278
    %v280 = vrot.slane %v78, %v279
    %v282 = vsel %vm193, %v265, 0
    %v285 = vsel %vm193, %v270, 0
    %287 = vmatprep.subr.mxu0 0.0
    %288 = vmatpush1.msra.mxu0 0.0
    %289 = vmatprep.subr.mxu0 0.0
    %290 = vmatpush1.msra.mxu0 0.0
    %291 = vmatprep.subr.mxu0 0.0
    %292 = vmatpush1.msra.mxu0 0.0
    %293 = vmatprep.subr.mxu0 0.0
    %294 = vmatpush1.msra.mxu0 0.0
    %295 = vmatprep.subr.mxu0 0.0
    %296 = vmatpush1.msra.mxu0 0.0
    %297 = vmatprep.subr.mxu0 0.0
    %298 = vmatpush1.msra.mxu0 0.0
    %299 = vmatprep.subr.mxu0 0.0
    %300 = vmatpush1.msra.mxu0 0.0
    %301 = vmatprep.subr.mxu0 0.0
    %302 = vmatpush1.msra.mxu0 0.0
    %303 = vmatprep.subr.mxu0 0.0
    %304 = vmatpush1.msra.mxu0 0.0
    %305 = vmatprep.subr.mxu0 0.0
    %306 = vmatpush1.msra.mxu0 0.0
    %307 = vmatprep.subr.mxu0 0.0
    %308 = vmatpush1.msra.mxu0 0.0
    %309 = vmatprep.subr.mxu0 0.0
    %310 = vmatpush1.msra.mxu0 0.0
    %311 = vmatprep.subr.mxu0 0.0
    %312 = vmatpush1.msra.mxu0 %v276
    %313 = vmatprep.subr.mxu0 0.0
    %314 = vmatpush1.msra.mxu0 %v275
    %315 = vmatprep.subr.mxu0 0.0
    %316 = vmatpush1.msra.mxu0 %v274
    %317 = vmatprep.subr.mxu0 0.0
    %318 = vmatpush1.msra.mxu0 %v273
    %319 = vmatprep.subr.mxu0 0.0
    %320 = vmatpush2.msra.mxu0 0.0
    %321 = vmatprep.subr.mxu0 0.0
    %322 = vmatpush2.msra.mxu0 0.0
    %323 = vmatprep.subr.mxu0 0.0
    %324 = vmatpush2.msra.mxu0 0.0
    %325 = vmatprep.subr.mxu0 0.0
    %326 = vmatpush2.msra.mxu0 0.0
    %327 = vmatprep.subr.mxu0 0.0
    %328 = vmatpush2.msra.mxu0 0.0
    %329 = vmatprep.subr.mxu0 0.0
    %330 = vmatpush2.msra.mxu0 0.0
    %331 = vmatprep.subr.mxu0 0.0
    %332 = vmatpush2.msra.mxu0 0.0
    %333 = vmatprep.subr.mxu0 0.0
    %334 = vmatpush2.msra.mxu0 0.0
    %335 = vmatprep.subr.mxu0 0.0
    %336 = vmatpush2.msra.mxu0 0.0
    %337 = vmatprep.subr.mxu0 0.0
    %338 = vmatpush2.msra.mxu0 0.0
    %339 = vmatprep.subr.mxu0 0.0
    %340 = vmatpush2.msra.mxu0 0.0
    %341 = vmatprep.subr.mxu0 0.0
    %342 = vmatpush2.msra.mxu0 0.0
    %343 = vmatprep.subr.mxu0 0.0
    %344 = vmatpush2.msra.mxu0 0.0
    %345 = vmatprep.subr.mxu0 0.0
    %346 = vmatpush2.msra.mxu0 0.0
    %347 = vmatprep.subr.mxu0 0.0
    %348 = vmatpush2.msra.mxu0 0.0
    %349 = vmatprep.subr.mxu0 0.0
    %350 = vmatpush2.msra.mxu0 0.0
    %351 = vmatprep.mubr.f32.mxu0 0.0
    %352 = vmatmul.mubr.f32.gmra.mxu0 %v282
    %v353 = vpop.f32.mrf.mxu0
    %v354 = vadd.f32 %v280, %v353
    %v355 = vpop.f32.mrf.mxu0
    %356 = vmatprep.mubr.f32.mxu0 0.0
    %357 = vmatmul.mubr.f32.gmra.mxu0 %v285
    %v358 = vpop.f32.mrf.mxu0
    %v359 = vadd.f32 %v280, %v358
    %v360 = vpop.f32.mrf.mxu0
    %361 = vdwg.mxu0
    %v362 = vxor.u32 %v354, 2147483648
    %v363 = vxor.u32 %v359, 2147483648
    %v364 = vmul.f32 %v362, 1.442695
    %v365 = vpow.pop %v364
    %v366 = vmul.f32 %v363, 1.442695
    %v367 = vpow.pop %v366
    %v368 = vadd.f32 %v365, 1.0
    %v369 = vadd.f32 %v367, 1.0
    %v370 = vrcp.pop %v368
    %v371 = vmul.f32 1.0, %v370
    %v372 = vrcp.pop %v369
    %v373 = vmul.f32 1.0, %v372
    %376 = vrot.lane.b32.xlu0 %v354, 32
    %v377 = vpop.permute.xlu0 %376
    %378 = vrot.lane.b32.xlu0 %v359, 32
    %v379 = vpop.permute.xlu0 %378
    %v382 = vmul.f32 %v371, %v377
    %v383 = vmul.f32 %v373, %v379
    %386 = vrot.lane.b32.xlu0 %v159, 32
    %v387 = vpop.permute.xlu0 %386
    %388 = vrot.lane.b32.xlu0 %v164, 32
    %v389 = vpop.permute.xlu0 %388
    %v392 = vadd.f32 %v382, %v387
    %v393 = vadd.f32 %v383, %v389
    %396 = vrot.lane.b32.xlu0 %v392, 96
    %v397 = vpop.permute.xlu0 %396
    %398 = vrot.lane.b32.xlu0 %v393, 96
    %v399 = vpop.permute.xlu0 %398
    %402 = vst.msk [vmem:[#allocation10] sm:$0xff] %vm193, %v397
    %403 = vst.msk [vmem:[#allocation10 + $0x8] sm:$0xff] %vm193, %v399
    // Predicated region
    $region38: #{tpu_custom_call.1} parent=1 // pred_check
      _
    $region39: #{tpu_custom_call.1} parent=1 // pred_check_branch
      %405 = sbr.rel (0) target = $region41
    $region40: #{tpu_custom_call.1} parent=1 // pred_region
      %s407 = ssub.s32 256, 256
      %408 = vsyncadd [#allocation4], %s407
      %s409 = sshll.u32 [#allocation10], 4
      %s410 = int_to_ptr.vmem [resolvable:$true] %s409
      %415 = dma.vmem_to_hbm [thread:$0]  %s410, 256, %s5, [#allocation4], 128, 128, 8
    $region41: #{tpu_custom_call.1} parent=1 // pred_fallthru
      _
    // Predicated region
    $region42: #{tpu_custom_call.1} parent=1 // pred_check
      _
    $region43: #{tpu_custom_call.1} parent=1 // pred_check_branch
      %417 = sbr.rel (0) target = $region45
    $region44: #{tpu_custom_call.1} parent=1 // pred_region
      %418 = dma.done [#allocation4], 256
    $region45: #{tpu_custom_call.1} parent=1 // pred_fallthru
      _
    %419 = vsyncpa [#allocation3], 1
    %420 = vsyncpa [#allocation6], 1
    %421 = vsyncpa [#allocation9], 1
    %422 = vsyncpa [#allocation4], 1

</llo_original>
